<compile_context>
chip_gen: v5e
topology: v5e:2x2
jax: 0.10.0
libtpu: 0.0.40
codegen_flags: <defaults>
</compile_context>

<pallas_src>
import functools

import jax
import jax.numpy as jnp
from jax.experimental import pallas as pl
from jax.experimental.pallas import tpu as pltpu

_LANE = 128


def _scaled_sigmoid_kernel(x_ref, o_ref, *, mult):
    x = x_ref[...].astype(jnp.float32)
    z = x * (1.0 / mult)                      # scaled_input = input / mult
    y = 1.0 / (1.0 + jnp.exp(-z))             # sigmoid (EUP exp + VPU ops)
    o_ref[...] = (y * mult).astype(o_ref.dtype)


@functools.partial(jax.jit, static_argnames=("mult", "block_rows"))
def scaled_sigmoid(x, *, mult, block_rows=1024):
    """Elementwise sigmoid(x / mult) * mult, any input shape/float dtype."""
    orig_shape = x.shape
    orig_dtype = x.dtype

    flat = x.reshape(-1)
    n = flat.shape[0]

    # Lay the data out lane-dense: 128 lanes wide, rows along sublanes.
    rows = pl.cdiv(n, _LANE)
    tm = min(block_rows, ((rows + 7) // 8) * 8)   # tile rows: multiple of 8
    padded_rows = pl.cdiv(rows, tm) * tm
    padded_n = padded_rows * _LANE
    if padded_n != n:
        flat = jnp.pad(flat, (0, padded_n - n))
    x2 = flat.reshape(padded_rows, _LANE)

    grid = (padded_rows // tm,)
    itemsize = jnp.dtype(orig_dtype).itemsize
    cost = pl.CostEstimate(
        flops=4 * n, transcendentals=n, bytes_accessed=2 * n * itemsize)

    out = pl.pallas_call(
        functools.partial(_scaled_sigmoid_kernel, mult=float(mult)),
        out_shape=jax.ShapeDtypeStruct((padded_rows, _LANE), orig_dtype),
        grid=grid,
        in_specs=[pl.BlockSpec((tm, _LANE), lambda i: (i, 0))],
        out_specs=pl.BlockSpec((tm, _LANE), lambda i: (i, 0)),
        compiler_params=pltpu.CompilerParams(
            dimension_semantics=("parallel",)),
        cost_estimate=cost,
    )(x2)

    return out.reshape(-1)[:n].reshape(orig_shape)


if __name__ == "__main__":
    key = jax.random.PRNGKey(0)
    mult = 2.5

    # Small example shape consistent with an elementwise activation module.
    x = jax.random.normal(key, (2, 4, 16, 16), jnp.float32)

    y = scaled_sigmoid(x, mult=mult)
    y = jax.block_until_ready(y)

    # Pure-JAX reference: sigmoid(input / mult) * mult
    ref = jax.nn.sigmoid(x / mult) * mult
    assert y.shape == x.shape
    assert y.dtype == x.dtype
    assert jnp.allclose(y, ref, atol=1e-6, rtol=1e-6)

    print("KERNEL_OK")
</pallas_src>

<mosaic_0001>
module attributes {stable_mosaic.version = 11 : i64} {
  func.func @_scaled_sigmoid_kernel(%arg0: i32, %arg1: memref<16x128xf32, #tpu.memory_space<vmem>>, %arg2: memref<16x128xf32, #tpu.memory_space<vmem>>) attributes {dimension_semantics = [#tpu.dimension_semantics<parallel>], iteration_bounds = array<i64: 1>, scalar_prefetch = 0 : i64, scratch_operands = 0 : i64, tpu.core_type = #tpu.core_type<tc>, window_params = [{transform_indices = @transform_0, window_bounds = array<i64: 16, 128>}, {transform_indices = @transform_1, window_bounds = array<i64: 16, 128>}]} {
    %c0 = arith.constant 0 : index
    %c0_0 = arith.constant 0 : index
    %0 = vector.load %arg1[%c0, %c0_0] : memref<16x128xf32, #tpu.memory_space<vmem>>, vector<16x128xf32>
    %cst = arith.constant 4.000000e-01 : f32
    %1 = vector.broadcast %cst : f32 to vector<16x128xf32>
    %2 = arith.mulf %0, %1 : vector<16x128xf32>
    %cst_1 = arith.constant 0.000000e+00 : f32
    %3 = vector.broadcast %cst_1 : f32 to vector<16x128xf32>
    %4 = arith.subf %3, %2 : vector<16x128xf32>
    %5 = math.exp %4 : vector<16x128xf32>
    %cst_2 = arith.constant 1.000000e+00 : f32
    %6 = vector.broadcast %cst_2 : f32 to vector<16x128xf32>
    %7 = arith.addf %6, %5 : vector<16x128xf32>
    %cst_3 = arith.constant 1.000000e+00 : f32
    %8 = vector.broadcast %cst_3 : f32 to vector<16x128xf32>
    %9 = arith.divf %8, %7 : vector<16x128xf32>
    %cst_4 = arith.constant 2.500000e+00 : f32
    %10 = vector.broadcast %cst_4 : f32 to vector<16x128xf32>
    %11 = arith.mulf %9, %10 : vector<16x128xf32>
    %c0_5 = arith.constant 0 : index
    %c0_6 = arith.constant 0 : index
    %12 = vector.load %arg2[%c0_5, %c0_6] : memref<16x128xf32, #tpu.memory_space<vmem>>, vector<16x128xf32>
    tpu.vector_store %arg2[%c0_5, %c0_6], %11 {strides = array<i32>} : memref<16x128xf32, #tpu.memory_space<vmem>>, vector<16x128xf32>,
    return
  }
  func.func @transform_0(%arg0: i32) -> (i32, i32) {
    %c0_i32 = arith.constant 0 : i32
    %c0_i32_0 = arith.constant 0 : i32
    return %arg0, %c0_i32 : i32, i32
  }
  func.func @transform_1(%arg0: i32) -> (i32, i32) {
    %c0_i32 = arith.constant 0 : i32
    %c0_i32_0 = arith.constant 0 : i32
    return %arg0, %c0_i32 : i32, i32
  }
}

</mosaic_0001>

<llo_original>
// kernel: scaled_sigmoid.1
$region0: #{scaled_sigmoid.1}
  #allocation0 [shape = 'u32[]', space=smem, size = 0x4, offset = 0x4, fixed_abs, tag = 'smem constant byte address 0x4 - core index']
  #allocation1 [shape = 'u32[72,128]{1,0:T(1,128)}', space=vmem, size = 0x9000, scoped, tag = 'internal scratch']
  %s0 = inlined_call_operand.vmem [shape: f32[16,128], index: 0, kind: input, shape index: {}]
  %s1 = inlined_call_operand.vmem [shape: f32[16,128], index: 1, kind: output, shape index: {}]
  %s2 = sld [smem:[#allocation0]]
  $region14: #{scaled_sigmoid.1} parent=0
    _
  %s4 = ssub.s32 1, %s2
  %s5 = scalar_select 0, %s4, %s2
  // Predicated region
  $region2: #{scaled_sigmoid.1} parent=0 // pred_check
    _
  $region3: #{scaled_sigmoid.1} parent=0 // pred_check_branch
    %7 = sbr.rel (0) target = $region5
  $region4: #{scaled_sigmoid.1} parent=0 // pred_region
    _
  $region5: #{scaled_sigmoid.1} parent=0 // pred_fallthru
    _
  %v8 = vld [vmem:[%s0] sm:$0xff]
  %v9 = vld [vmem:[%s0 + $0x8] sm:$0xff]
  %v10 = vmul.f32 %v8, 0.4
  %v11 = vmul.f32 %v9, 0.4
  %v12 = vsub.f32 0.0, %v10
  %v13 = vsub.f32 0.0, %v11
  %v14 = vmul.f32 %v12, 1.442695
  %v15 = vpow.pop %v14
  %v16 = vmul.f32 %v13, 1.442695
  %v17 = vpow.pop %v16
  %v18 = vadd.f32 %v15, 1.0
  %v19 = vadd.f32 %v17, 1.0
  %v20 = vrcp.pop %v18
  %v21 = vmul.f32 %v18, %v20
  %v22 = vsub.f32 1.0, %v21
  %v23 = vmul.f32 %v20, %v22
  %v24 = vadd.f32 %v20, %v23
  %vm25 = vweird.f32 %v18
  %vm26 = vweird.f32 %v20
  %vm27 = vmor %vm25, %vm26
  %v28 = vsel %vm27, %v20, %v24
  %v29 = vand.u32 2147483647, %v18
  %vm30 = vcmp.eq.f32.partialorder %v29, 8.507059e+37
  %v31 = vand.u32 %v18, 2147483648
  %v32 = vor.u32 1.1754944e-38, %v31
  %v33 = vsel %vm30, %v32, %v28
  %v34 = vmul.f32 1.0, %v33
  %v35 = vrcp.pop %v19
  %v36 = vmul.f32 %v19, %v35
  %v37 = vsub.f32 1.0, %v36
  %v38 = vmul.f32 %v35, %v37
  %v39 = vadd.f32 %v35, %v38
  %vm40 = vweird.f32 %v19
  %vm41 = vweird.f32 %v35
  %vm42 = vmor %vm40, %vm41
  %v43 = vsel %vm42, %v35, %v39
  %v44 = vand.u32 2147483647, %v19
  %vm45 = vcmp.eq.f32.partialorder %v44, 8.507059e+37
  %v46 = vand.u32 %v19, 2147483648
  %v47 = vor.u32 1.1754944e-38, %v46
  %v48 = vsel %vm45, %v47, %v43
  %v49 = vmul.f32 1.0, %v48
  %v50 = vmul.f32 %v34, 2.5
  %v51 = vmul.f32 %v49, 2.5
  %52 = vst [vmem:[%s1] sm:$0xff] %v50
  %53 = vst [vmem:[%s1 + $0x8] sm:$0xff] %v51
  // Predicated region
  $region6: #{scaled_sigmoid.1} parent=0 // pred_check
    _
  $region7: #{scaled_sigmoid.1} parent=0 // pred_check_branch
    %55 = sbr.rel (0) target = $region9
  $region8: #{scaled_sigmoid.1} parent=0 // pred_region
    _
  $region9: #{scaled_sigmoid.1} parent=0 // pred_fallthru
    _
  // Predicated region
  $region10: #{scaled_sigmoid.1} parent=0 // pred_check
    _
  $region11: #{scaled_sigmoid.1} parent=0 // pred_check_branch
    %57 = sbr.rel (0) target = $region13
  $region12: #{scaled_sigmoid.1} parent=0 // pred_region
    _
  $region13: #{scaled_sigmoid.1} parent=0 // pred_fallthru
    _

</llo_original>
